<compile_context>
chip_gen: v5e
topology: v5e:2x2
jax: 0.10.0
libtpu: 0.0.40
codegen_flags: <defaults>
</compile_context>

<pallas_src>
import functools
import math

import numpy as np

import jax
import jax.numpy as jnp
from jax.experimental import pallas as pl
from jax.experimental.pallas import tpu as pltpu

_TARGET_TILE_BYTES = 2 << 20   # ~2 MiB output per grid step (x2 for double buffer)


def _round_up(n: int, m: int) -> int:
    return ((n + m - 1) // m) * m


@functools.lru_cache(maxsize=None)
def _tables(dim: int, r: int):
    """Precomputed constant tables for a given (dim, packing factor r).

    r == 1 : freq table (1, dim)            and phase table (1, dim)
    r  > 1 : scatter matrix fmat (r, r*dim) and phase table (1, r*dim)
             fmat[j, k] = freq_full[k % dim] if k // dim == j else 0,
             so (rows, r) @ fmat both scatters each packed position into its
             lane segment and applies the frequency scale in a single MXU op.
    """
    half = dim // 2
    scale = math.log(10000.0) / (half - 1)
    freqs = np.exp(np.arange(half, dtype=np.float64) * -scale).astype(np.float32)
    freq_full = np.concatenate([freqs, freqs])                                # (dim,)
    phase = np.concatenate([np.zeros(half, np.float32),
                            np.full(half, np.pi / 2.0, np.float32)])          # (dim,)
    phase_t = np.tile(phase, r)[None, :]                                      # (1, r*dim)
    if r == 1:
        return jnp.asarray(freq_full[None, :]), jnp.asarray(phase_t)
    fmat = np.zeros((r, r * dim), np.float32)
    for j in range(r):
        fmat[j, j * dim:(j + 1) * dim] = freq_full
    return jnp.asarray(fmat), jnp.asarray(phase_t)


def _kernel_r1(x_ref, freq_ref, phase_ref, out_ref):
    # x_ref: (rows, 1)   freq/phase: (1, dim)   out: (rows, dim), dim % 128 == 0
    emb = x_ref[...] * freq_ref[...] + phase_ref[...]
    out_ref[...] = jnp.sin(emb).astype(out_ref.dtype)


def _kernel_packed(x_ref, fmat_ref, phase_ref, out_ref):
    # x_ref: (rows, r)   fmat: (r, r*dim)   phase: (1, r*dim)   out: (rows, r*dim)
    # Tiny MXU matmul does the lane scatter + frequency scale; MXU is otherwise idle.
    emb = jnp.dot(x_ref[...], fmat_ref[...], preferred_element_type=jnp.float32)
    emb = emb + phase_ref[...]
    out_ref[...] = jnp.sin(emb).astype(out_ref.dtype)


def sinusoidal_pos_emb(x, dim, *, out_dtype=jnp.float32,
                       target_tile_bytes=_TARGET_TILE_BYTES):
    """Pallas equivalent of SinusoidalPosEmb(dim)(x) for a 1-D x of positions."""
    assert x.ndim == 1, "expects a 1-D tensor of positions, like the torch module"
    assert dim % 2 == 0, "dim must be even (torch module silently truncates otherwise)"
    assert dim >= 4, "dim must be >= 4 so half_dim - 1 > 0"
    b = x.shape[0]

    # Pack r positions per stored row so the stored last dim is a 128-multiple
    # (unmasked full-width stores). dim even => r <= 64.
    r = 128 // math.gcd(dim, 128)
    row_align = 8 * r                       # keeps the packed row count 8-aligned

    out_itemsize = jnp.dtype(out_dtype).itemsize
    # Rows per grid step from a byte budget (>= row_align, row_align-aligned).
    budget_rows = max(row_align,
                      (target_tile_bytes // (dim * out_itemsize)) // row_align * row_align)
    n = -(-b // budget_rows)                # number of grid steps
    if b >= 2 * row_align:
        n = max(n, 2)                       # >= 2 steps -> megacore sharding on v7x
    bt = _round_up(-(-b // n), row_align)   # original-batch rows per grid step
    b_pad = n * bt                          # bounded overshoot: <= n * row_align rows
    rows = bt // r                          # packed rows per grid step (multiple of 8)

    x32 = x.astype(jnp.float32)
    if b_pad != b:
        x32 = jnp.pad(x32, (0, b_pad - b))

    tab_a, tab_b = _tables(dim, r)          # (freq or fmat, phase)

    cost = pl.CostEstimate(
        flops=2 * b_pad * dim * r,
        transcendentals=b_pad * dim,
        bytes_accessed=b_pad * dim * out_itemsize + b_pad * 4,
    )
    cparams = pltpu.CompilerParams(dimension_semantics=("parallel",))

    if r == 1:
        x_in = x32.reshape(b_pad, 1)
        out = pl.pallas_call(
            _kernel_r1,
            out_shape=jax.ShapeDtypeStruct((b_pad, dim), out_dtype),
            grid=(n,),
            in_specs=[
                pl.BlockSpec((bt, 1), lambda i: (i, 0)),
                pl.BlockSpec((1, dim), lambda i: (0, 0)),
                pl.BlockSpec((1, dim), lambda i: (0, 0)),
            ],
            out_specs=pl.BlockSpec((bt, dim), lambda i: (i, 0)),
            compiler_params=cparams,
            cost_estimate=cost,
        )(x_in, tab_a, tab_b)
    else:
        x_in = x32.reshape(b_pad // r, r)
        out_packed = pl.pallas_call(
            _kernel_packed,
            out_shape=jax.ShapeDtypeStruct((b_pad // r, r * dim), out_dtype),
            grid=(n,),
            in_specs=[
                pl.BlockSpec((rows, r), lambda i: (i, 0)),
                pl.BlockSpec((r, r * dim), lambda i: (0, 0)),
                pl.BlockSpec((1, r * dim), lambda i: (0, 0)),
            ],
            out_specs=pl.BlockSpec((rows, r * dim), lambda i: (i, 0)),
            compiler_params=cparams,
            cost_estimate=cost,
        )(x_in, tab_a, tab_b)
        # Row-major reshape (b_pad/r, r*dim) -> (b_pad, dim) is free.
        out = out_packed.reshape(b_pad, dim)

    if b_pad != b:
        out = out[:b]
    return out


def _reference(x, dim):
    half_dim = dim // 2
    scale = math.log(10000.0) / (half_dim - 1)
    freqs = jnp.exp(jnp.arange(half_dim, dtype=jnp.float32) * -scale)
    emb = x.astype(jnp.float32)[:, None] * freqs[None, :]
    return jnp.concatenate([jnp.sin(emb), jnp.cos(emb)], axis=-1)


if __name__ == "__main__":
    # Config 1: lane-packed MXU-scatter path (dim=32 -> r=4, packed width 128).
    batch, dim = 8, 32
    x = jax.random.uniform(jax.random.PRNGKey(0), (batch,), jnp.float32,
                           minval=0.0, maxval=100.0)
    out = jax.block_until_ready(sinusoidal_pos_emb(x, dim))
    assert out.shape == (batch, dim), out.shape
    assert jnp.allclose(out, _reference(x, dim), atol=1e-4, rtol=1e-4), \
        "mismatch vs reference (packed r=4 path)"

    # Config 2: already lane-dense path (dim=128 -> r=1).
    batch2, dim2 = 16, 128
    x2 = jax.random.uniform(jax.random.PRNGKey(1), (batch2,), jnp.float32,
                            minval=0.0, maxval=100.0)
    out2 = jax.block_until_ready(sinusoidal_pos_emb(x2, dim2))
    assert out2.shape == (batch2, dim2), out2.shape
    assert jnp.allclose(out2, _reference(x2, dim2), atol=1e-4, rtol=1e-4), \
        "mismatch vs reference (r=1 path)"

    # Config 3: generalized packing for a non-power-of-two dim (dim=96 -> r=4,
    # packed width 384) with a ragged batch exercising the bounded padding.
    batch3, dim3 = 10, 96
    x3 = jax.random.uniform(jax.random.PRNGKey(2), (batch3,), jnp.float32,
                            minval=0.0, maxval=100.0)
    out3 = jax.block_until_ready(sinusoidal_pos_emb(x3, dim3))
    assert out3.shape == (batch3, dim3), out3.shape
    assert jnp.allclose(out3, _reference(x3, dim3), atol=1e-4, rtol=1e-4), \
        "mismatch vs reference (packed r=4, dim=96 path)"

    print("KERNEL_OK")
</pallas_src>

<mosaic_0001>
module attributes {stable_mosaic.version = 11 : i64} {
  func.func @_kernel_packed(%arg0: i32, %arg1: memref<8x4xf32, #tpu.memory_space<vmem>>, %arg2: memref<4x128xf32, #tpu.memory_space<vmem>>, %arg3: memref<1x128xf32, #tpu.memory_space<vmem>>, %arg4: memref<8x128xf32, #tpu.memory_space<vmem>>) attributes {dimension_semantics = [#tpu.dimension_semantics<parallel>], iteration_bounds = array<i64: 1>, scalar_prefetch = 0 : i64, scratch_operands = 0 : i64, tpu.core_type = #tpu.core_type<tc>, window_params = [{transform_indices = @transform_0, window_bounds = array<i64: 8, 4>}, {pipeline_mode = #tpu.pipeline_mode<synchronous>, transform_indices = @transform_1, window_bounds = array<i64: 4, 128>}, {pipeline_mode = #tpu.pipeline_mode<synchronous>, transform_indices = @transform_2, window_bounds = array<i64: 1, 128>}, {transform_indices = @transform_3, window_bounds = array<i64: 8, 128>}]} {
    %c0 = arith.constant 0 : index
    %c0_0 = arith.constant 0 : index
    %0 = vector.load %arg1[%c0, %c0_0] : memref<8x4xf32, #tpu.memory_space<vmem>>, vector<8x4xf32>
    %c0_1 = arith.constant 0 : index
    %c0_2 = arith.constant 0 : index
    %1 = vector.load %arg2[%c0_1, %c0_2] : memref<4x128xf32, #tpu.memory_space<vmem>>, vector<4x128xf32>
    %cst = arith.constant dense<0.000000e+00> : vector<8x128xf32>
    %2 = tpu.matmul %0, %1, %cst {dimension_numbers = #tpu.dot_dimension_numbers<[1], [0], [0], [1], [0, 0, 1, 1], [], []>} : vector<8x4xf32>, vector<4x128xf32>, vector<8x128xf32> -> vector<8x128xf32>
    %c0_3 = arith.constant 0 : index
    %c0_4 = arith.constant 0 : index
    %3 = vector.load %arg3[%c0_3, %c0_4] : memref<1x128xf32, #tpu.memory_space<vmem>>, vector<1x128xf32>
    %4 = vector.broadcast %3 : vector<1x128xf32> to vector<8x128xf32>
    %5 = arith.addf %2, %4 : vector<8x128xf32>
    %6 = math.sin %5 : vector<8x128xf32>
    %c0_5 = arith.constant 0 : index
    %c0_6 = arith.constant 0 : index
    %7 = vector.load %arg4[%c0_5, %c0_6] : memref<8x128xf32, #tpu.memory_space<vmem>>, vector<8x128xf32>
    tpu.vector_store %arg4[%c0_5, %c0_6], %6 {strides = array<i32>} : memref<8x128xf32, #tpu.memory_space<vmem>>, vector<8x128xf32>,
    return
  }
  func.func @transform_0(%arg0: i32) -> (i32, i32) {
    %c0_i32 = arith.constant 0 : i32
    %c0_i32_0 = arith.constant 0 : i32
    return %arg0, %c0_i32 : i32, i32
  }
  func.func @transform_1(%arg0: i32) -> (i32, i32) {
    %c0_i32 = arith.constant 0 : i32
    %c0_i32_0 = arith.constant 0 : i32
    %c0_i32_1 = arith.constant 0 : i32
    return %c0_i32, %c0_i32_0 : i32, i32
  }
  func.func @transform_2(%arg0: i32) -> (i32, i32) {
    %c0_i32 = arith.constant 0 : i32
    %c0_i32_0 = arith.constant 0 : i32
    %c0_i32_1 = arith.constant 0 : i32
    return %c0_i32, %c0_i32_0 : i32, i32
  }
  func.func @transform_3(%arg0: i32) -> (i32, i32) {
    %c0_i32 = arith.constant 0 : i32
    %c0_i32_0 = arith.constant 0 : i32
    return %arg0, %c0_i32 : i32, i32
  }
}

</mosaic_0001>

<llo_original>
// kernel: tpu_custom_call.1
$region0: #{tpu_custom_call.1}
  #allocation0 [shape = 'u32[]', space=smem, size = 0x4, offset = 0x4, fixed_abs, tag = 'smem constant byte address 0x4 - core index']
  #allocation1 [shape = 'u32[72,128]{1,0:T(1,128)}', space=vmem, size = 0x9000, scoped, tag = 'internal scratch']
  %s0 = inlined_call_operand.vmem [shape: f32[8,4], index: 0, kind: input, shape index: {}]
  %s1 = inlined_call_operand.vmem [shape: f32[4,128], index: 1, kind: input, shape index: {}]
  %s2 = inlined_call_operand.vmem [shape: f32[1,128], index: 2, kind: input, shape index: {}]
  %s3 = inlined_call_operand.hbm [shape: f32[8,128], index: 3, kind: output, shape index: {}]
  %s4 = sld [smem:[#allocation0]]
  $region22: #{tpu_custom_call.1} parent=0
    _
  %s6 = ssub.s32 1, %s4
  %s7 = scalar_select 0, %s6, %s4
  $region1: #{tpu_custom_call.1} parent=0
    #allocation2 [shape = 'u8[4096]{0}', space=vmem, size = 0x1000, scoped, tag = 'output window, operand 0, single buffered']
    #allocation3 [shape = 's32[1]{0}', space=sflag, size = 0x4, scoped, tag = 'scoped memory for tpu_custom_call.1']
    %8 = vsyncpa [#allocation3], 0
    // Predicated region
    $region2: #{tpu_custom_call.1} parent=1 // pred_check
      _
    $region3: #{tpu_custom_call.1} parent=1 // pred_check_branch
      %10 = sbr.rel (0) target = $region5
    $region4: #{tpu_custom_call.1} parent=1 // pred_region
      _
    $region5: #{tpu_custom_call.1} parent=1 // pred_fallthru
      _
    // Predicated region
    $region6: #{tpu_custom_call.1} parent=1 // pred_check
      _
    $region7: #{tpu_custom_call.1} parent=1 // pred_check_branch
      %12 = sbr.rel (0) target = $region9
    $region8: #{tpu_custom_call.1} parent=1 // pred_region
      _
    $region9: #{tpu_custom_call.1} parent=1 // pred_fallthru
      _
    // Predicated region
    $region10: #{tpu_custom_call.1} parent=1 // pred_check
      _
    $region11: #{tpu_custom_call.1} parent=1 // pred_check_branch
      %14 = sbr.rel (0) target = $region13
    $region12: #{tpu_custom_call.1} parent=1 // pred_region
      _
    $region13: #{tpu_custom_call.1} parent=1 // pred_fallthru
      _
    %v15 = vld [vmem:[%s0] sm:$0xff]
    %v16 = vld [vmem:[%s1] sm:$0xf]
    %v17 = vld [vmem:[%s2] sm:$0x1]
    %v19 = vperm.slane %v17, 0
    %vm21 = vcmask 31744
    %v23 = vsel %vm21, %v15, 0
    %vm25 = vcmask 1043456
    %v27 = vsel %vm25, %v16, 0
    %29 = vmatpush.msra.mxu0 0.0
    %30 = vmatpush.msra.mxu0 0.0
    %31 = vmatpush.msra.mxu0 0.0
    %32 = vmatpush.msra.mxu0 0.0
    %33 = vmatpush.msra.mxu0 0.0
    %34 = vmatpush.msra.mxu0 0.0
    %35 = vmatpush.msra.mxu0 0.0
    %36 = vmatpush.msra.mxu0 0.0
    %37 = vmatpush.msra.mxu0 0.0
    %38 = vmatpush.msra.mxu0 0.0
    %39 = vmatpush.msra.mxu0 0.0
    %40 = vmatpush.msra.mxu0 0.0
    %41 = vmatpush.msra.mxu0 0.0
    %42 = vmatpush.msra.mxu0 0.0
    %43 = vmatpush.msra.mxu0 0.0
    %44 = vmatpush.msra.mxu0 %v27
    %45 = vmatmul.f32.gmra.mxu0 %v23
    %v46 = vpop.f32.mrf.mxu0
    %v47 = vadd.f32 %v19, %v46
    %48 = vdwg.mxu0
    %v49 = vand.u32 2147483647, %v47
    %vm50 = vcmp.le.f32.partialorder %v49, 0.7853982
    %vm51 = vcmp.lt.s32.totalorder %v47, 0
    %v52 = vand.u32 %v47, 2139095040
    %v53 = vshrl.u32 %v52, 23
    %v54 = vsub.s32 %v53, 127
    %v55 = vand.u32 2147483647, %v47
    %v56 = vand.u32 %v55, 8388607
    %v57 = vor.u32 %v56, 8388608
    %v58 = vsub.s32 0, %v57
    %v59 = vadd.s32 %v54, 1
    %vm60 = vcmp.gt.s32.totalorder %v59, 0
    %v61 = vsel %vm60, %v59, 0
    %v62 = vshrl.u32 %v61, 5
    %v63 = vand.u32 %v61, 31
    %v64 = vsub.s32 32, %v63
    %v65 = vshrl.u32 683565275, %v64
    %v66 = vshll.u32 683565275, %v63
    %v67 = vshrl.u32 2475754826, %v64
    %v68 = vor.u32 %v66, %v67
    %v69 = vshll.u32 2475754826, %v63
    %v70 = vshrl.u32 2131351028, %v64
    %v71 = vor.u32 %v69, %v70
    %v72 = vshll.u32 2131351028, %v63
    %v73 = vshrl.u32 2102212464, %v64
    %v74 = vor.u32 %v72, %v73
    %v75 = vshll.u32 2102212464, %v63
    %v76 = vshrl.u32 920167782, %v64
    %v77 = vor.u32 %v75, %v76
    %v78 = vshll.u32 920167782, %v63
    %v79 = vshrl.u32 1326507024, %v64
    %v80 = vor.u32 %v78, %v79
    %vm81 = vcmp.lt.s32.totalorder %v62, 1
    %vm82 = vcmp.lt.s32.totalorder %v62, 2
    %vm83 = vcmp.lt.s32.totalorder %v62, 3
    %vm84 = vcmp.lt.s32.totalorder %v62, 4
    %v85 = vsel %vm81, %v65, %v68
    %v86 = vsel %vm84, %v74, 2102212464
    %v87 = vsel %vm83, %v71, %v86
    %v88 = vsel %vm82, %v85, %v87
    %v89 = vsel %vm81, %v68, %v71
    %v90 = vsel %vm84, %v77, 920167782
    %v91 = vsel %vm83, %v74, %v90
    %v92 = vsel %vm82, %v89, %v91
    %v93 = vsel %vm81, %v71, %v74
    %v94 = vsel %vm84, %v80, 1326507024
    %v95 = vsel %vm83, %v77, %v94
    %v96 = vsel %vm82, %v93, %v95
    %v97 = vshll.u32 %v57, 8
    %v98 = vand.u32 %v97, 65535
    %v99 = vshrl.u32 %v97, 16
    %v100 = vand.u32 %v96, 65535
    %v101 = vshrl.u32 %v96, 16
    %v102 = vmul.u32 %v98, %v100
    %v103 = vmul.u32 %v98, %v101
    %v104 = vmul.u32 %v99, %v100
    %v105 = vmul.u32 %v99, %v101
    %v106 = vshll.u32 %v103, 16
    %v107 = vshrl.u32 %v103, 16
    %v108 = vshll.u32 %v104, 16
    %v109 = vshrl.u32 %v104, 16
    %vm110 = vc.u32 %v102, %v106
    %v111 = vsel %vm110, 1, 0
    %v112 = vadd.s32 %v102, %v106
    %v113 = vadd.s32 %v105, %v111
    %vm114 = vc.u32 %v112, %v108
    %v115 = vsel %vm114, 1, 0
    %v116 = vadd.s32 %v112, %v108
    %v117 = vadd.s32 %v113, %v115
    %v118 = vadd.s32 %v117, %v107
    %v119 = vadd.s32 %v118, %v109
    %v120 = vand.u32 %v97, 65535
    %v121 = vshrl.u32 %v97, 16
    %v122 = vand.u32 %v92, 65535
    %v123 = vshrl.u32 %v92, 16
    %v124 = vmul.u32 %v120, %v122
    %v125 = vmul.u32 %v120, %v123
    %v126 = vmul.u32 %v121, %v122
    %v127 = vmul.u32 %v121, %v123
    %v128 = vshll.u32 %v125, 16
    %v129 = vshrl.u32 %v125, 16
    %v130 = vshll.u32 %v126, 16
    %v131 = vshrl.u32 %v126, 16
    %vm132 = vc.u32 %v124, %v128
    %v133 = vsel %vm132, 1, 0
    %v134 = vadd.s32 %v124, %v128
    %v135 = vadd.s32 %v127, %v133
    %vm136 = vc.u32 %v134, %v130
    %v137 = vsel %vm136, 1, 0
    %v138 = vadd.s32 %v134, %v130
    %v139 = vadd.s32 %v135, %v137
    %v140 = vadd.s32 %v139, %v129
    %v141 = vadd.s32 %v140, %v131
    %v142 = vmul.u32 %v97, %v88
    %v143 = vadd.s32 %v119, %v138
    %vm144 = vc.u32 %v119, %v138
    %v145 = vadd.s32 %v141, 1
    %v146 = vsel %vm144, %v145, %v141
    %v147 = vadd.s32 %v142, %v146
    %v148 = vadd.s32 %v147, 536870912
    %v149 = vshrl.u32 %v148, 30
    %v150 = vshll.u32 %v149, 30
    %v151 = vsub.s32 %v147, %v150
    %vm152 = vcmp.lt.s32.totalorder %v151, 0
    %v153 = vsub.s32 0, %v151
    %v154 = vsel %vm152, %v153, %v151
    %v155 = vclz %v154
    %v156 = vsub.s32 %v155, 2
    %vm157 = vcmp.gt.s32.totalorder 0, %v156
    %v158 = vsel %vm157, 0, %v156
    %v159 = vsub.s32 32, %v158
    %v160 = vshll.u32 %v151, %v158
    %v161 = vshrl.u32 %v143, %v159
    %v162 = vor.u32 %v160, %v161
    %v163 = vsub.s32 4294967266, %v158
    %v164 = vadd.s32 %v163, 127
    %v165 = vshll.u32 %v164, 23
    %v166 = vor.u32 4788187, %v165
    %v167 = vand.u32 2147483647, %v166
    %v169 = vcvt.s32.f32 %v162
    %v170 = vmul.f32 %v169, %v167
    %v171 = vxor.u32 %v170, 2147483648
    %v172 = vsel %vm51, %v171, %v170
    %v173 = vsub.s32 4, %v149
    %v174 = vsel %vm51, %v173, %v149
    %v175 = vsel %vm50, %v47, %v172
    %v176 = vsel %vm50, 0, %v174
    %v177 = vmul.f32 %v175, %v175
    %v178 = vmul.f32 %v177, -0.001358992
    %v179 = vadd.f32 %v178, 0.041655596
    %v180 = vmul.f32 %v177, %v179
    %v181 = vadd.f32 %v180, -0.4999988
    %v182 = vmul.f32 %v177, %v181
    %v183 = vadd.f32 1.0, %v182
    %v184 = vmul.f32 %v175, %v175
    %v185 = vmul.f32 %v184, -0.00019511016
    %v186 = vadd.f32 %v185, 0.008332121
    %v187 = vmul.f32 %v184, %v186
    %v188 = vadd.f32 %v187, -0.16666654
    %v189 = vmul.f32 %v184, %v188
    %v190 = vadd.f32 %v189, 1.0
    %v191 = vmul.f32 %v190, %v175
    %vm192 = vweird.f32 %v47
    %v193 = vadd.s32 %v176, 3
    %v194 = vand.u32 %v193, 3
    %vm195 = vcmp.lt.s32.totalorder %v194, 2
    %vm196 = vcmp.eq.s32.totalorder %v194, 0
    %v197 = vxor.u32 %v191, 2147483648
    %v198 = vsel %vm196, %v183, %v197
    %vm199 = vcmp.eq.s32.totalorder %v194, 2
    %v200 = vxor.u32 %v183, 2147483648
    %v201 = vsel %vm199, %v200, %v191
    %v202 = vsel %vm195, %v198, %v201
    %v203 = vsel %vm192, nan, %v202
    %204 = vst [vmem:[#allocation2] sm:$0xff] %v203
    // Predicated region
    $region14: #{tpu_custom_call.1} parent=1 // pred_check
      _
    $region15: #{tpu_custom_call.1} parent=1 // pred_check_branch
      %206 = sbr.rel (0) target = $region17
    $region16: #{tpu_custom_call.1} parent=1 // pred_region
      %208 = vsyncadd [#allocation3], 0
      %s210 = sshll.u32 [#allocation2], 4
      %s211 = int_to_ptr.vmem [resolvable:$true] %s210
      %s212 = sshll.u32 %s3, 4
      %s213 = int_to_ptr.hbm [resolvable:$true] %s212
      %215 = dma.vmem_to_hbm [thread:$0]  %s211, 128, %s213, [#allocation3]
    $region17: #{tpu_custom_call.1} parent=1 // pred_fallthru
      _
    // Predicated region
    $region18: #{tpu_custom_call.1} parent=1 // pred_check
      _
    $region19: #{tpu_custom_call.1} parent=1 // pred_check_branch
      %217 = sbr.rel (0) target = $region21
    $region20: #{tpu_custom_call.1} parent=1 // pred_region
      %219 = dma.done [#allocation3], 128
    $region21: #{tpu_custom_call.1} parent=1 // pred_fallthru
      _
    %220 = vsyncpa [#allocation3], 1

</llo_original>
